<compile_context>
chip_gen: v7x
topology: tpu7x:2x2x1
jax: 0.10.0
libtpu: 0.0.40
codegen_flags: <defaults>
</compile_context>

<pallas_src>
import functools
import math

import jax
import jax.numpy as jnp
from jax import lax
from jax.experimental import pallas as pl
from jax.experimental.pallas import tpu as pltpu
import numpy as np


def _round_up(n, m):
    return ((n + m - 1) // m) * m


def _erf_poly(x):
    # Abramowitz & Stegun 7.1.26, |abs error| <= 1.5e-7. Built only from ops
    # guaranteed to lower in Mosaic (exp on EUP, mul/add/select on VPU).
    a1, a2, a3, a4, a5 = (0.254829592, -0.284496736, 1.421413741,
                          -1.453152027, 1.061405429)
    p = 0.3275911
    ax = jnp.abs(x)
    t = 1.0 / (1.0 + p * ax)
    poly = ((((a5 * t + a4) * t + a3) * t + a2) * t + a1) * t
    y = 1.0 - poly * jnp.exp(-(ax * ax))
    return jnp.where(x < 0, -y, y)


def _gelu(x, approximate):
    if approximate:
        # tanh approximation -> native EUP transcendental (perf mode).
        return jax.nn.gelu(x, approximate=True)
    # PyTorch nn.GELU() default: exact erf-based GELU.
    return 0.5 * x * (1.0 + _erf_poly(x * (1.0 / math.sqrt(2.0))))


def _onedcnn_kernel(x_ref, p_ref, o_ref, *, kernel_size, feature,
                    approximate_gelu):
    K = kernel_size
    F = feature

    x = x_ref[...]                        # (TR, Lp) lane-dense
    TR, Lp = x.shape
    params = p_ref[...]                   # (TR, 2K+2+F*K+F) packed per-row

    col = [0]

    def take(n):
        s = col[0]
        col[0] += n
        return params[:, s:s + n]

    w1, b1 = take(K), take(1)
    w2, b2 = take(K), take(1)
    w3, b3 = take(F * K), take(F)

    def shifts(h):
        # Tap shifts via XLU rolls (idle slot otherwise). Wrap garbage only
        # lands at lanes >= Lp-(K-1), which downstream valid positions never
        # read (invariant asserted in the wrapper).
        return [h] + [pltpu.roll(h, Lp - k, axis=1) for k in range(1, K)]

    def dwconv(hs, w, b):
        # out[r, i] = sum_k hs[k][r, i] * w[r, k] + b[r]
        acc = hs[0] * w[:, 0:1] + b
        for k in range(1, K):
            acc = acc + hs[k] * w[:, k:k + 1]
        return acc

    h1 = _gelu(dwconv(shifts(x), w1, b1), approximate_gelu)
    h2 = _gelu(dwconv(shifts(h1), w2, b2), approximate_gelu)

    h2s = shifts(h2)                      # hoisted: shared by all F features
    for f in range(F):                    # static unroll over channel multiplier
        h3 = _gelu(dwconv(h2s, w3[:, f * K:(f + 1) * K], b3[:, f:f + 1]),
                   approximate_gelu)
        # f*Lp is a multiple of 128 -> unmasked lane-dense stores.
        o_ref[:, f * Lp:(f + 1) * Lp] = h3.astype(o_ref.dtype)


def onedcnn_forward(x, params, *, kernel_size, feature,
                    compute_dtype=jnp.float32, approximate_gelu=False,
                    row_tile=None):
    """x: (B, C, L) float32 -> (B, C, feature, L - 3*(K-1)) float32."""
    B, C, L = x.shape
    K = kernel_size
    F = feature
    assert L > 3 * (K - 1), (
        f"length L={L} too short for three valid convs with kernel_size={K}")
    L3 = L - 3 * (K - 1)

    w1, b1, w2, b2, w3, b3 = params
    cd = jnp.dtype(compute_dtype)

    rows = B * C
    Lp = _round_up(max(L, 128), 128)      # lane-dense length

    # Roll-wrap safety: garbage lands at lanes >= Lp-(K-1); the deepest
    # position any valid output consumes from a rolled buffer is L-K.
    assert L - K < Lp - (K - 1), "roll wrap region would be consumed"

    rows8 = _round_up(rows, 8)
    if row_tile is None:
        # Per-step VMEM: double-buffered input (TR,Lp) + output (TR,F*Lp) +
        # ~(2K+4) fused intermediates. Keep one step near ~10 MiB so the
        # 32 MiB scoped limit is safe even on v7x's 64 MiB physical VMEM.
        per_row = Lp * cd.itemsize * (2 + 2 * F + 2 * K + 4)
        row_tile = (10 * 1024 * 1024) // max(per_row, 1)
        row_tile = max(8, min(1024, (row_tile // 8) * 8))
    TR = max(8, min(row_tile, rows8))
    if rows8 > 8:
        # v7x has 2 TensorCores: keep >= 2 grid steps on the "parallel" axis.
        TR = min(TR, _round_up((rows8 + 1) // 2, 8))
    TR = max(8, (TR // 8) * 8)
    rows_p = _round_up(rows, TR)
    n_row_tiles = rows_p // TR

    # Fold (batch, channel) into rows; pad to (rows_p, Lp) with zeros.
    x2 = jnp.reshape(x, (rows, L)).astype(cd)
    x2 = jnp.pad(x2, ((0, rows_p - rows), (0, Lp - L)))

    # Pack all per-channel parameters into ONE per-row operand:
    #   [w1(K) | b1(1) | w2(K) | b2(1) | w3(F*K) | b3(F)]
    packed = jnp.concatenate(
        [w1.reshape(C, K), b1.reshape(C, 1),
         w2.reshape(C, K), b2.reshape(C, 1),
         w3.reshape(C, F * K), b3.reshape(C, F)], axis=1).astype(cd)
    W = packed.shape[1]
    packed = jnp.tile(packed, (B, 1))         # row r -> channel r % C
    packed = jnp.pad(packed, ((0, rows_p - rows), (0, 0)))

    kern = functools.partial(_onedcnn_kernel, kernel_size=K, feature=F,
                             approximate_gelu=approximate_gelu)

    out_p = pl.pallas_call(
        kern,
        out_shape=jax.ShapeDtypeStruct((rows_p, F * Lp), cd),
        grid=(n_row_tiles,),
        in_specs=[
            pl.BlockSpec((TR, Lp), lambda r: (r, 0)),     # x
            pl.BlockSpec((TR, W), lambda r: (r, 0)),      # packed params
        ],
        out_specs=pl.BlockSpec((TR, F * Lp), lambda r: (r, 0)),
        compiler_params=pltpu.CompilerParams(
            dimension_semantics=("parallel",),
            vmem_limit_bytes=32 * 1024 * 1024),
    )(x2, packed)

    # (rows_p, F*Lp) -> (B, C, F, L3): reshape + crop only, no transpose.
    out = out_p[:rows].reshape(B, C, F, Lp)[..., :L3]
    return out.astype(jnp.float32)


def _reference_forward(x, params, *, kernel_size, feature):
    # Pure-jnp fp32 reference matching PyTorch Conv1d(groups=in_chan,
    # padding='valid') + exact nn.GELU() semantics.
    w1, b1, w2, b2, w3, b3 = params
    B, C, L = x.shape
    K = kernel_size
    F = feature

    def gelu(v):
        return 0.5 * v * (1.0 + lax.erf(v / math.sqrt(2.0)))

    def dw(h, w, b):                       # (B,C,Lin),(C,K),(C,) -> (B,C,Lout)
        Lout = h.shape[-1] - K + 1
        acc = b.reshape(1, C, 1)
        for k in range(K):
            acc = acc + h[:, :, k:k + Lout] * w[:, k].reshape(1, C, 1)
        return acc

    h = gelu(dw(x, w1.reshape(C, K), b1.reshape(C)))
    h = gelu(dw(h, w2.reshape(C, K), b2.reshape(C)))
    Lout = h.shape[-1] - K + 1
    acc = b3.reshape(1, C, F, 1)
    for k in range(K):
        acc = acc + h[:, :, None, k:k + Lout] * w3[:, :, k].reshape(1, C, F, 1)
    return gelu(acc)                       # (B, C, F, Lout)


def init_params(key, in_chan, feature, kernel_size):
    # Deterministic synthetic init (PyTorch-style uniform(-1/sqrt(K), 1/sqrt(K))).
    K = kernel_size
    bound = 1.0 / math.sqrt(K)
    ks = jax.random.split(key, 6)
    u = lambda k, shape: jax.random.uniform(k, shape, jnp.float32, -bound, bound)
    w1 = u(ks[0], (in_chan, K))
    b1 = u(ks[1], (in_chan, 1))
    w2 = u(ks[2], (in_chan, K))
    b2 = u(ks[3], (in_chan, 1))
    w3 = u(ks[4], (in_chan, feature, K))
    b3 = u(ks[5], (in_chan, feature))
    return (w1, b1, w2, b2, w3, b3)


if __name__ == "__main__":
    B, C, L = 2, 4, 16          # batch, in_chan, length
    feature = 3
    kernel_size = 3

    key = jax.random.PRNGKey(0)
    kx, kp = jax.random.split(key)
    x = jax.random.normal(kx, (B, C, L), jnp.float32)
    params = init_params(kp, C, feature, kernel_size)

    out = onedcnn_forward(x, params, kernel_size=kernel_size, feature=feature)
    out = jax.block_until_ready(out)

    ref = _reference_forward(x, params, kernel_size=kernel_size, feature=feature)
    ref = jax.block_until_ready(ref)

    assert out.shape == (B, C, feature, L - 3 * (kernel_size - 1)), out.shape
    np.testing.assert_allclose(np.asarray(out), np.asarray(ref),
                               rtol=1e-5, atol=1e-5)
    print("KERNEL_OK")
</pallas_src>

<mosaic_0001>
module attributes {stable_mosaic.version = 11 : i64} {
  func.func @_onedcnn_kernel(%arg0: i32, %arg1: memref<8x128xf32, #tpu.memory_space<vmem>>, %arg2: memref<8x20xf32, #tpu.memory_space<vmem>>, %arg3: memref<8x384xf32, #tpu.memory_space<vmem>>) attributes {dimension_semantics = [#tpu.dimension_semantics<parallel>], iteration_bounds = array<i64: 1>, scalar_prefetch = 0 : i64, scratch_operands = 0 : i64, tpu.core_type = #tpu.core_type<tc>, window_params = [{transform_indices = @transform_0, window_bounds = array<i64: 8, 128>}, {transform_indices = @transform_1, window_bounds = array<i64: 8, 20>}, {transform_indices = @transform_2, window_bounds = array<i64: 8, 384>}]} {
    %c0 = arith.constant 0 : index
    %c0_0 = arith.constant 0 : index
    %0 = vector.load %arg1[%c0, %c0_0] : memref<8x128xf32, #tpu.memory_space<vmem>>, vector<8x128xf32>
    %c0_1 = arith.constant 0 : index
    %c0_2 = arith.constant 0 : index
    %1 = vector.load %arg2[%c0_1, %c0_2] : memref<8x20xf32, #tpu.memory_space<vmem>>, vector<8x20xf32>
    %2 = vector.extract_strided_slice %1 {offsets = [0, 0], sizes = [8, 3], strides = [1, 1]} : vector<8x20xf32> to vector<8x3xf32>
    %3 = vector.extract_strided_slice %1 {offsets = [0, 3], sizes = [8, 1], strides = [1, 1]} : vector<8x20xf32> to vector<8x1xf32>
    %4 = vector.extract_strided_slice %1 {offsets = [0, 4], sizes = [8, 3], strides = [1, 1]} : vector<8x20xf32> to vector<8x3xf32>
    %5 = vector.extract_strided_slice %1 {offsets = [0, 7], sizes = [8, 1], strides = [1, 1]} : vector<8x20xf32> to vector<8x1xf32>
    %6 = vector.extract_strided_slice %1 {offsets = [0, 8], sizes = [8, 9], strides = [1, 1]} : vector<8x20xf32> to vector<8x9xf32>
    %7 = vector.extract_strided_slice %1 {offsets = [0, 17], sizes = [8, 3], strides = [1, 1]} : vector<8x20xf32> to vector<8x3xf32>
    %c127_i32 = arith.constant 127 : i32
    %8 = tpu.dynamic_rotate %0 by %c127_i32 dim 1 : vector<8x128xf32>, i32 -> vector<8x128xf32>
    %c126_i32 = arith.constant 126 : i32
    %9 = tpu.dynamic_rotate %0 by %c126_i32 dim 1 : vector<8x128xf32>, i32 -> vector<8x128xf32>
    %10 = vector.extract_strided_slice %2 {offsets = [0, 0], sizes = [8, 1], strides = [1, 1]} : vector<8x3xf32> to vector<8x1xf32>
    %11 = vector.broadcast %10 : vector<8x1xf32> to vector<8x128xf32>
    %12 = arith.mulf %0, %11 : vector<8x128xf32>
    %13 = vector.broadcast %3 : vector<8x1xf32> to vector<8x128xf32>
    %14 = arith.addf %12, %13 : vector<8x128xf32>
    %15 = vector.extract_strided_slice %2 {offsets = [0, 1], sizes = [8, 1], strides = [1, 1]} : vector<8x3xf32> to vector<8x1xf32>
    %16 = vector.broadcast %15 : vector<8x1xf32> to vector<8x128xf32>
    %17 = arith.mulf %8, %16 : vector<8x128xf32>
    %18 = arith.addf %14, %17 : vector<8x128xf32>
    %19 = vector.extract_strided_slice %2 {offsets = [0, 2], sizes = [8, 1], strides = [1, 1]} : vector<8x3xf32> to vector<8x1xf32>
    %20 = vector.broadcast %19 : vector<8x1xf32> to vector<8x128xf32>
    %21 = arith.mulf %9, %20 : vector<8x128xf32>
    %22 = arith.addf %18, %21 : vector<8x128xf32>
    %cst = arith.constant 5.000000e-01 : f32
    %23 = vector.broadcast %cst : f32 to vector<8x128xf32>
    %24 = arith.mulf %23, %22 : vector<8x128xf32>
    %cst_3 = arith.constant 0.707106769 : f32
    %25 = vector.broadcast %cst_3 : f32 to vector<8x128xf32>
    %26 = arith.mulf %22, %25 : vector<8x128xf32>
    %27 = math.absf %26 : vector<8x128xf32>
    %cst_4 = arith.constant 0.327591091 : f32
    %28 = vector.broadcast %cst_4 : f32 to vector<8x128xf32>
    %29 = arith.mulf %28, %27 : vector<8x128xf32>
    %cst_5 = arith.constant 1.000000e+00 : f32
    %30 = vector.broadcast %cst_5 : f32 to vector<8x128xf32>
    %31 = arith.addf %30, %29 : vector<8x128xf32>
    %cst_6 = arith.constant 1.000000e+00 : f32
    %32 = vector.broadcast %cst_6 : f32 to vector<8x128xf32>
    %33 = arith.divf %32, %31 : vector<8x128xf32>
    %cst_7 = arith.constant 1.06140542 : f32
    %34 = vector.broadcast %cst_7 : f32 to vector<8x128xf32>
    %35 = arith.mulf %34, %33 : vector<8x128xf32>
    %cst_8 = arith.constant -1.45315206 : f32
    %36 = vector.broadcast %cst_8 : f32 to vector<8x128xf32>
    %37 = arith.addf %35, %36 : vector<8x128xf32>
    %38 = arith.mulf %37, %33 : vector<8x128xf32>
    %cst_9 = arith.constant 1.42141378 : f32
    %39 = vector.broadcast %cst_9 : f32 to vector<8x128xf32>
    %40 = arith.addf %38, %39 : vector<8x128xf32>
    %41 = arith.mulf %40, %33 : vector<8x128xf32>
    %cst_10 = arith.constant -0.284496725 : f32
    %42 = vector.broadcast %cst_10 : f32 to vector<8x128xf32>
    %43 = arith.addf %41, %42 : vector<8x128xf32>
    %44 = arith.mulf %43, %33 : vector<8x128xf32>
    %cst_11 = arith.constant 0.254829586 : f32
    %45 = vector.broadcast %cst_11 : f32 to vector<8x128xf32>
    %46 = arith.addf %44, %45 : vector<8x128xf32>
    %47 = arith.mulf %46, %33 : vector<8x128xf32>
    %48 = arith.mulf %27, %27 : vector<8x128xf32>
    %cst_12 = arith.constant 0.000000e+00 : f32
    %49 = vector.broadcast %cst_12 : f32 to vector<8x128xf32>
    %50 = arith.subf %49, %48 : vector<8x128xf32>
    %51 = math.exp %50 : vector<8x128xf32>
    %52 = arith.mulf %47, %51 : vector<8x128xf32>
    %cst_13 = arith.constant 1.000000e+00 : f32
    %53 = vector.broadcast %cst_13 : f32 to vector<8x128xf32>
    %54 = arith.subf %53, %52 : vector<8x128xf32>
    %cst_14 = arith.constant 0.000000e+00 : f32
    %55 = vector.broadcast %cst_14 : f32 to vector<8x128xf32>
    %56 = arith.cmpf olt, %26, %55 : vector<8x128xf32>
    %cst_15 = arith.constant 0.000000e+00 : f32
    %57 = vector.broadcast %cst_15 : f32 to vector<8x128xf32>
    %58 = arith.subf %57, %54 : vector<8x128xf32>
    %59 = arith.select %56, %58, %54 : vector<8x128xi1>, vector<8x128xf32>
    %cst_16 = arith.constant 1.000000e+00 : f32
    %60 = vector.broadcast %cst_16 : f32 to vector<8x128xf32>
    %61 = arith.addf %60, %59 : vector<8x128xf32>
    %62 = arith.mulf %24, %61 : vector<8x128xf32>
    %c127_i32_17 = arith.constant 127 : i32
    %63 = tpu.dynamic_rotate %62 by %c127_i32_17 dim 1 : vector<8x128xf32>, i32 -> vector<8x128xf32>
    %c126_i32_18 = arith.constant 126 : i32
    %64 = tpu.dynamic_rotate %62 by %c126_i32_18 dim 1 : vector<8x128xf32>, i32 -> vector<8x128xf32>
    %65 = vector.extract_strided_slice %4 {offsets = [0, 0], sizes = [8, 1], strides = [1, 1]} : vector<8x3xf32> to vector<8x1xf32>
    %66 = vector.broadcast %65 : vector<8x1xf32> to vector<8x128xf32>
    %67 = arith.mulf %62, %66 : vector<8x128xf32>
    %68 = vector.broadcast %5 : vector<8x1xf32> to vector<8x128xf32>
    %69 = arith.addf %67, %68 : vector<8x128xf32>
    %70 = vector.extract_strided_slice %4 {offsets = [0, 1], sizes = [8, 1], strides = [1, 1]} : vector<8x3xf32> to vector<8x1xf32>
    %71 = vector.broadcast %70 : vector<8x1xf32> to vector<8x128xf32>
    %72 = arith.mulf %63, %71 : vector<8x128xf32>
    %73 = arith.addf %69, %72 : vector<8x128xf32>
    %74 = vector.extract_strided_slice %4 {offsets = [0, 2], sizes = [8, 1], strides = [1, 1]} : vector<8x3xf32> to vector<8x1xf32>
    %75 = vector.broadcast %74 : vector<8x1xf32> to vector<8x128xf32>
    %76 = arith.mulf %64, %75 : vector<8x128xf32>
    %77 = arith.addf %73, %76 : vector<8x128xf32>
    %cst_19 = arith.constant 5.000000e-01 : f32
    %78 = vector.broadcast %cst_19 : f32 to vector<8x128xf32>
    %79 = arith.mulf %78, %77 : vector<8x128xf32>
    %cst_20 = arith.constant 0.707106769 : f32
    %80 = vector.broadcast %cst_20 : f32 to vector<8x128xf32>
    %81 = arith.mulf %77, %80 : vector<8x128xf32>
    %82 = math.absf %81 : vector<8x128xf32>
    %cst_21 = arith.constant 0.327591091 : f32
    %83 = vector.broadcast %cst_21 : f32 to vector<8x128xf32>
    %84 = arith.mulf %83, %82 : vector<8x128xf32>
    %cst_22 = arith.constant 1.000000e+00 : f32
    %85 = vector.broadcast %cst_22 : f32 to vector<8x128xf32>
    %86 = arith.addf %85, %84 : vector<8x128xf32>
    %cst_23 = arith.constant 1.000000e+00 : f32
    %87 = vector.broadcast %cst_23 : f32 to vector<8x128xf32>
    %88 = arith.divf %87, %86 : vector<8x128xf32>
    %cst_24 = arith.constant 1.06140542 : f32
    %89 = vector.broadcast %cst_24 : f32 to vector<8x128xf32>
    %90 = arith.mulf %89, %88 : vector<8x128xf32>
    %cst_25 = arith.constant -1.45315206 : f32
    %91 = vector.broadcast %cst_25 : f32 to vector<8x128xf32>
    %92 = arith.addf %90, %91 : vector<8x128xf32>
    %93 = arith.mulf %92, %88 : vector<8x128xf32>
    %cst_26 = arith.constant 1.42141378 : f32
    %94 = vector.broadcast %cst_26 : f32 to vector<8x128xf32>
    %95 = arith.addf %93, %94 : vector<8x128xf32>
    %96 = arith.mulf %95, %88 : vector<8x128xf32>
    %cst_27 = arith.constant -0.284496725 : f32
    %97 = vector.broadcast %cst_27 : f32 to vector<8x128xf32>
    %98 = arith.addf %96, %97 : vector<8x128xf32>
    %99 = arith.mulf %98, %88 : vector<8x128xf32>
    %cst_28 = arith.constant 0.254829586 : f32
    %100 = vector.broadcast %cst_28 : f32 to vector<8x128xf32>
    %101 = arith.addf %99, %100 : vector<8x128xf32>
    %102 = arith.mulf %101, %88 : vector<8x128xf32>
    %103 = arith.mulf %82, %82 : vector<8x128xf32>
    %cst_29 = arith.constant 0.000000e+00 : f32
    %104 = vector.broadcast %cst_29 : f32 to vector<8x128xf32>
    %105 = arith.subf %104, %103 : vector<8x128xf32>
    %106 = math.exp %105 : vector<8x128xf32>
    %107 = arith.mulf %102, %106 : vector<8x128xf32>
    %cst_30 = arith.constant 1.000000e+00 : f32
    %108 = vector.broadcast %cst_30 : f32 to vector<8x128xf32>
    %109 = arith.subf %108, %107 : vector<8x128xf32>
    %cst_31 = arith.constant 0.000000e+00 : f32
    %110 = vector.broadcast %cst_31 : f32 to vector<8x128xf32>
    %111 = arith.cmpf olt, %81, %110 : vector<8x128xf32>
    %cst_32 = arith.constant 0.000000e+00 : f32
    %112 = vector.broadcast %cst_32 : f32 to vector<8x128xf32>
    %113 = arith.subf %112, %109 : vector<8x128xf32>
    %114 = arith.select %111, %113, %109 : vector<8x128xi1>, vector<8x128xf32>
    %cst_33 = arith.constant 1.000000e+00 : f32
    %115 = vector.broadcast %cst_33 : f32 to vector<8x128xf32>
    %116 = arith.addf %115, %114 : vector<8x128xf32>
    %117 = arith.mulf %79, %116 : vector<8x128xf32>
    %c127_i32_34 = arith.constant 127 : i32
    %118 = tpu.dynamic_rotate %117 by %c127_i32_34 dim 1 : vector<8x128xf32>, i32 -> vector<8x128xf32>
    %c126_i32_35 = arith.constant 126 : i32
    %119 = tpu.dynamic_rotate %117 by %c126_i32_35 dim 1 : vector<8x128xf32>, i32 -> vector<8x128xf32>
    %120 = vector.extract_strided_slice %6 {offsets = [0, 0], sizes = [8, 3], strides = [1, 1]} : vector<8x9xf32> to vector<8x3xf32>
    %121 = vector.extract_strided_slice %7 {offsets = [0, 0], sizes = [8, 1], strides = [1, 1]} : vector<8x3xf32> to vector<8x1xf32>
    %122 = vector.extract_strided_slice %120 {offsets = [0, 0], sizes = [8, 1], strides = [1, 1]} : vector<8x3xf32> to vector<8x1xf32>
    %123 = vector.broadcast %122 : vector<8x1xf32> to vector<8x128xf32>
    %124 = arith.mulf %117, %123 : vector<8x128xf32>
    %125 = vector.broadcast %121 : vector<8x1xf32> to vector<8x128xf32>
    %126 = arith.addf %124, %125 : vector<8x128xf32>
    %127 = vector.extract_strided_slice %120 {offsets = [0, 1], sizes = [8, 1], strides = [1, 1]} : vector<8x3xf32> to vector<8x1xf32>
    %128 = vector.broadcast %127 : vector<8x1xf32> to vector<8x128xf32>
    %129 = arith.mulf %118, %128 : vector<8x128xf32>
    %130 = arith.addf %126, %129 : vector<8x128xf32>
    %131 = vector.extract_strided_slice %120 {offsets = [0, 2], sizes = [8, 1], strides = [1, 1]} : vector<8x3xf32> to vector<8x1xf32>
    %132 = vector.broadcast %131 : vector<8x1xf32> to vector<8x128xf32>
    %133 = arith.mulf %119, %132 : vector<8x128xf32>
    %134 = arith.addf %130, %133 : vector<8x128xf32>
    %cst_36 = arith.constant 5.000000e-01 : f32
    %135 = vector.broadcast %cst_36 : f32 to vector<8x128xf32>
    %136 = arith.mulf %135, %134 : vector<8x128xf32>
    %cst_37 = arith.constant 0.707106769 : f32
    %137 = vector.broadcast %cst_37 : f32 to vector<8x128xf32>
    %138 = arith.mulf %134, %137 : vector<8x128xf32>
    %139 = math.absf %138 : vector<8x128xf32>
    %cst_38 = arith.constant 0.327591091 : f32
    %140 = vector.broadcast %cst_38 : f32 to vector<8x128xf32>
    %141 = arith.mulf %140, %139 : vector<8x128xf32>
    %cst_39 = arith.constant 1.000000e+00 : f32
    %142 = vector.broadcast %cst_39 : f32 to vector<8x128xf32>
    %143 = arith.addf %142, %141 : vector<8x128xf32>
    %cst_40 = arith.constant 1.000000e+00 : f32
    %144 = vector.broadcast %cst_40 : f32 to vector<8x128xf32>
    %145 = arith.divf %144, %143 : vector<8x128xf32>
    %cst_41 = arith.constant 1.06140542 : f32
    %146 = vector.broadcast %cst_41 : f32 to vector<8x128xf32>
    %147 = arith.mulf %146, %145 : vector<8x128xf32>
    %cst_42 = arith.constant -1.45315206 : f32
    %148 = vector.broadcast %cst_42 : f32 to vector<8x128xf32>
    %149 = arith.addf %147, %148 : vector<8x128xf32>
    %150 = arith.mulf %149, %145 : vector<8x128xf32>
    %cst_43 = arith.constant 1.42141378 : f32
    %151 = vector.broadcast %cst_43 : f32 to vector<8x128xf32>
    %152 = arith.addf %150, %151 : vector<8x128xf32>
    %153 = arith.mulf %152, %145 : vector<8x128xf32>
    %cst_44 = arith.constant -0.284496725 : f32
    %154 = vector.broadcast %cst_44 : f32 to vector<8x128xf32>
    %155 = arith.addf %153, %154 : vector<8x128xf32>
    %156 = arith.mulf %155, %145 : vector<8x128xf32>
    %cst_45 = arith.constant 0.254829586 : f32
    %157 = vector.broadcast %cst_45 : f32 to vector<8x128xf32>
    %158 = arith.addf %156, %157 : vector<8x128xf32>
    %159 = arith.mulf %158, %145 : vector<8x128xf32>
    %160 = arith.mulf %139, %139 : vector<8x128xf32>
    %cst_46 = arith.constant 0.000000e+00 : f32
    %161 = vector.broadcast %cst_46 : f32 to vector<8x128xf32>
    %162 = arith.subf %161, %160 : vector<8x128xf32>
    %163 = math.exp %162 : vector<8x128xf32>
    %164 = arith.mulf %159, %163 : vector<8x128xf32>
    %cst_47 = arith.constant 1.000000e+00 : f32
    %165 = vector.broadcast %cst_47 : f32 to vector<8x128xf32>
    %166 = arith.subf %165, %164 : vector<8x128xf32>
    %cst_48 = arith.constant 0.000000e+00 : f32
    %167 = vector.broadcast %cst_48 : f32 to vector<8x128xf32>
    %168 = arith.cmpf olt, %138, %167 : vector<8x128xf32>
    %cst_49 = arith.constant 0.000000e+00 : f32
    %169 = vector.broadcast %cst_49 : f32 to vector<8x128xf32>
    %170 = arith.subf %169, %166 : vector<8x128xf32>
    %171 = arith.select %168, %170, %166 : vector<8x128xi1>, vector<8x128xf32>
    %cst_50 = arith.constant 1.000000e+00 : f32
    %172 = vector.broadcast %cst_50 : f32 to vector<8x128xf32>
    %173 = arith.addf %172, %171 : vector<8x128xf32>
    %174 = arith.mulf %136, %173 : vector<8x128xf32>
    %c0_51 = arith.constant 0 : index
    %c0_52 = arith.constant 0 : index
    %175 = vector.load %arg3[%c0_51, %c0_52] : memref<8x384xf32, #tpu.memory_space<vmem>>, vector<8x128xf32>
    tpu.vector_store %arg3[%c0_51, %c0_52], %174 {strides = array<i32>} : memref<8x384xf32, #tpu.memory_space<vmem>>, vector<8x128xf32>,
    %176 = vector.extract_strided_slice %6 {offsets = [0, 3], sizes = [8, 3], strides = [1, 1]} : vector<8x9xf32> to vector<8x3xf32>
    %177 = vector.extract_strided_slice %7 {offsets = [0, 1], sizes = [8, 1], strides = [1, 1]} : vector<8x3xf32> to vector<8x1xf32>
    %178 = vector.extract_strided_slice %176 {offsets = [0, 0], sizes = [8, 1], strides = [1, 1]} : vector<8x3xf32> to vector<8x1xf32>
    %179 = vector.broadcast %178 : vector<8x1xf32> to vector<8x128xf32>
    %180 = arith.mulf %117, %179 : vector<8x128xf32>
    %181 = vector.broadcast %177 : vector<8x1xf32> to vector<8x128xf32>
    %182 = arith.addf %180, %181 : vector<8x128xf32>
    %183 = vector.extract_strided_slice %176 {offsets = [0, 1], sizes = [8, 1], strides = [1, 1]} : vector<8x3xf32> to vector<8x1xf32>
    %184 = vector.broadcast %183 : vector<8x1xf32> to vector<8x128xf32>
    %185 = arith.mulf %118, %184 : vector<8x128xf32>
    %186 = arith.addf %182, %185 : vector<8x128xf32>
    %187 = vector.extract_strided_slice %176 {offsets = [0, 2], sizes = [8, 1], strides = [1, 1]} : vector<8x3xf32> to vector<8x1xf32>
    %188 = vector.broadcast %187 : vector<8x1xf32> to vector<8x128xf32>
    %189 = arith.mulf %119, %188 : vector<8x128xf32>
    %190 = arith.addf %186, %189 : vector<8x128xf32>
    %cst_53 = arith.constant 5.000000e-01 : f32
    %191 = vector.broadcast %cst_53 : f32 to vector<8x128xf32>
    %192 = arith.mulf %191, %190 : vector<8x128xf32>
    %cst_54 = arith.constant 0.707106769 : f32
    %193 = vector.broadcast %cst_54 : f32 to vector<8x128xf32>
    %194 = arith.mulf %190, %193 : vector<8x128xf32>
    %195 = math.absf %194 : vector<8x128xf32>
    %cst_55 = arith.constant 0.327591091 : f32
    %196 = vector.broadcast %cst_55 : f32 to vector<8x128xf32>
    %197 = arith.mulf %196, %195 : vector<8x128xf32>
    %cst_56 = arith.constant 1.000000e+00 : f32
    %198 = vector.broadcast %cst_56 : f32 to vector<8x128xf32>
    %199 = arith.addf %198, %197 : vector<8x128xf32>
    %cst_57 = arith.constant 1.000000e+00 : f32
    %200 = vector.broadcast %cst_57 : f32 to vector<8x128xf32>
    %201 = arith.divf %200, %199 : vector<8x128xf32>
    %cst_58 = arith.constant 1.06140542 : f32
    %202 = vector.broadcast %cst_58 : f32 to vector<8x128xf32>
    %203 = arith.mulf %202, %201 : vector<8x128xf32>
    %cst_59 = arith.constant -1.45315206 : f32
    %204 = vector.broadcast %cst_59 : f32 to vector<8x128xf32>
    %205 = arith.addf %203, %204 : vector<8x128xf32>
    %206 = arith.mulf %205, %201 : vector<8x128xf32>
    %cst_60 = arith.constant 1.42141378 : f32
    %207 = vector.broadcast %cst_60 : f32 to vector<8x128xf32>
    %208 = arith.addf %206, %207 : vector<8x128xf32>
    %209 = arith.mulf %208, %201 : vector<8x128xf32>
    %cst_61 = arith.constant -0.284496725 : f32
    %210 = vector.broadcast %cst_61 : f32 to vector<8x128xf32>
    %211 = arith.addf %209, %210 : vector<8x128xf32>
    %212 = arith.mulf %211, %201 : vector<8x128xf32>
    %cst_62 = arith.constant 0.254829586 : f32
    %213 = vector.broadcast %cst_62 : f32 to vector<8x128xf32>
    %214 = arith.addf %212, %213 : vector<8x128xf32>
    %215 = arith.mulf %214, %201 : vector<8x128xf32>
    %216 = arith.mulf %195, %195 : vector<8x128xf32>
    %cst_63 = arith.constant 0.000000e+00 : f32
    %217 = vector.broadcast %cst_63 : f32 to vector<8x128xf32>
    %218 = arith.subf %217, %216 : vector<8x128xf32>
    %219 = math.exp %218 : vector<8x128xf32>
    %220 = arith.mulf %215, %219 : vector<8x128xf32>
    %cst_64 = arith.constant 1.000000e+00 : f32
    %221 = vector.broadcast %cst_64 : f32 to vector<8x128xf32>
    %222 = arith.subf %221, %220 : vector<8x128xf32>
    %cst_65 = arith.constant 0.000000e+00 : f32
    %223 = vector.broadcast %cst_65 : f32 to vector<8x128xf32>
    %224 = arith.cmpf olt, %194, %223 : vector<8x128xf32>
    %cst_66 = arith.constant 0.000000e+00 : f32
    %225 = vector.broadcast %cst_66 : f32 to vector<8x128xf32>
    %226 = arith.subf %225, %222 : vector<8x128xf32>
    %227 = arith.select %224, %226, %222 : vector<8x128xi1>, vector<8x128xf32>
    %cst_67 = arith.constant 1.000000e+00 : f32
    %228 = vector.broadcast %cst_67 : f32 to vector<8x128xf32>
    %229 = arith.addf %228, %227 : vector<8x128xf32>
    %230 = arith.mulf %192, %229 : vector<8x128xf32>
    %c0_68 = arith.constant 0 : index
    %c128 = arith.constant 128 : index
    %231 = vector.load %arg3[%c0_68, %c128] : memref<8x384xf32, #tpu.memory_space<vmem>>, vector<8x128xf32>
    tpu.vector_store %arg3[%c0_68, %c128], %230 {strides = array<i32>} : memref<8x384xf32, #tpu.memory_space<vmem>>, vector<8x128xf32>,
    %232 = vector.extract_strided_slice %6 {offsets = [0, 6], sizes = [8, 3], strides = [1, 1]} : vector<8x9xf32> to vector<8x3xf32>
    %233 = vector.extract_strided_slice %7 {offsets = [0, 2], sizes = [8, 1], strides = [1, 1]} : vector<8x3xf32> to vector<8x1xf32>
    %234 = vector.extract_strided_slice %232 {offsets = [0, 0], sizes = [8, 1], strides = [1, 1]} : vector<8x3xf32> to vector<8x1xf32>
    %235 = vector.broadcast %234 : vector<8x1xf32> to vector<8x128xf32>
    %236 = arith.mulf %117, %235 : vector<8x128xf32>
    %237 = vector.broadcast %233 : vector<8x1xf32> to vector<8x128xf32>
    %238 = arith.addf %236, %237 : vector<8x128xf32>
    %239 = vector.extract_strided_slice %232 {offsets = [0, 1], sizes = [8, 1], strides = [1, 1]} : vector<8x3xf32> to vector<8x1xf32>
    %240 = vector.broadcast %239 : vector<8x1xf32> to vector<8x128xf32>
    %241 = arith.mulf %118, %240 : vector<8x128xf32>
    %242 = arith.addf %238, %241 : vector<8x128xf32>
    %243 = vector.extract_strided_slice %232 {offsets = [0, 2], sizes = [8, 1], strides = [1, 1]} : vector<8x3xf32> to vector<8x1xf32>
    %244 = vector.broadcast %243 : vector<8x1xf32> to vector<8x128xf32>
    %245 = arith.mulf %119, %244 : vector<8x128xf32>
    %246 = arith.addf %242, %245 : vector<8x128xf32>
    %cst_69 = arith.constant 5.000000e-01 : f32
    %247 = vector.broadcast %cst_69 : f32 to vector<8x128xf32>
    %248 = arith.mulf %247, %246 : vector<8x128xf32>
    %cst_70 = arith.constant 0.707106769 : f32
    %249 = vector.broadcast %cst_70 : f32 to vector<8x128xf32>
    %250 = arith.mulf %246, %249 : vector<8x128xf32>
    %251 = math.absf %250 : vector<8x128xf32>
    %cst_71 = arith.constant 0.327591091 : f32
    %252 = vector.broadcast %cst_71 : f32 to vector<8x128xf32>
    %253 = arith.mulf %252, %251 : vector<8x128xf32>
    %cst_72 = arith.constant 1.000000e+00 : f32
    %254 = vector.broadcast %cst_72 : f32 to vector<8x128xf32>
    %255 = arith.addf %254, %253 : vector<8x128xf32>
    %cst_73 = arith.constant 1.000000e+00 : f32
    %256 = vector.broadcast %cst_73 : f32 to vector<8x128xf32>
    %257 = arith.divf %256, %255 : vector<8x128xf32>
    %cst_74 = arith.constant 1.06140542 : f32
    %258 = vector.broadcast %cst_74 : f32 to vector<8x128xf32>
    %259 = arith.mulf %258, %257 : vector<8x128xf32>
    %cst_75 = arith.constant -1.45315206 : f32
    %260 = vector.broadcast %cst_75 : f32 to vector<8x128xf32>
    %261 = arith.addf %259, %260 : vector<8x128xf32>
    %262 = arith.mulf %261, %257 : vector<8x128xf32>
    %cst_76 = arith.constant 1.42141378 : f32
    %263 = vector.broadcast %cst_76 : f32 to vector<8x128xf32>
    %264 = arith.addf %262, %263 : vector<8x128xf32>
    %265 = arith.mulf %264, %257 : vector<8x128xf32>
    %cst_77 = arith.constant -0.284496725 : f32
    %266 = vector.broadcast %cst_77 : f32 to vector<8x128xf32>
    %267 = arith.addf %265, %266 : vector<8x128xf32>
    %268 = arith.mulf %267, %257 : vector<8x128xf32>
    %cst_78 = arith.constant 0.254829586 : f32
    %269 = vector.broadcast %cst_78 : f32 to vector<8x128xf32>
    %270 = arith.addf %268, %269 : vector<8x128xf32>
    %271 = arith.mulf %270, %257 : vector<8x128xf32>
    %272 = arith.mulf %251, %251 : vector<8x128xf32>
    %cst_79 = arith.constant 0.000000e+00 : f32
    %273 = vector.broadcast %cst_79 : f32 to vector<8x128xf32>
    %274 = arith.subf %273, %272 : vector<8x128xf32>
    %275 = math.exp %274 : vector<8x128xf32>
    %276 = arith.mulf %271, %275 : vector<8x128xf32>
    %cst_80 = arith.constant 1.000000e+00 : f32
    %277 = vector.broadcast %cst_80 : f32 to vector<8x128xf32>
    %278 = arith.subf %277, %276 : vector<8x128xf32>
    %cst_81 = arith.constant 0.000000e+00 : f32
    %279 = vector.broadcast %cst_81 : f32 to vector<8x128xf32>
    %280 = arith.cmpf olt, %250, %279 : vector<8x128xf32>
    %cst_82 = arith.constant 0.000000e+00 : f32
    %281 = vector.broadcast %cst_82 : f32 to vector<8x128xf32>
    %282 = arith.subf %281, %278 : vector<8x128xf32>
    %283 = arith.select %280, %282, %278 : vector<8x128xi1>, vector<8x128xf32>
    %cst_83 = arith.constant 1.000000e+00 : f32
    %284 = vector.broadcast %cst_83 : f32 to vector<8x128xf32>
    %285 = arith.addf %284, %283 : vector<8x128xf32>
    %286 = arith.mulf %248, %285 : vector<8x128xf32>
    %c0_84 = arith.constant 0 : index
    %c256 = arith.constant 256 : index
    %287 = vector.load %arg3[%c0_84, %c256] : memref<8x384xf32, #tpu.memory_space<vmem>>, vector<8x128xf32>
    tpu.vector_store %arg3[%c0_84, %c256], %286 {strides = array<i32>} : memref<8x384xf32, #tpu.memory_space<vmem>>, vector<8x128xf32>,
    return
  }
  func.func @transform_0(%arg0: i32) -> (i32, i32) {
    %c0_i32 = arith.constant 0 : i32
    %c0_i32_0 = arith.constant 0 : i32
    return %arg0, %c0_i32 : i32, i32
  }
  func.func @transform_1(%arg0: i32) -> (i32, i32) {
    %c0_i32 = arith.constant 0 : i32
    %c0_i32_0 = arith.constant 0 : i32
    return %arg0, %c0_i32 : i32, i32
  }
  func.func @transform_2(%arg0: i32) -> (i32, i32) {
    %c0_i32 = arith.constant 0 : i32
    %c0_i32_0 = arith.constant 0 : i32
    return %arg0, %c0_i32 : i32, i32
  }
}

</mosaic_0001>

<llo_original>
// kernel: tpu_custom_call.1
$region0: #{tpu_custom_call.1}
  #allocation0 [shape = 'u32[]', space=smem, size = 0x4, offset = 0x4, fixed_abs, tag = 'smem constant byte address 0x4 - core index']
  #allocation1 [shape = 'u32[144,128]{1,0:T(1,128)}', space=vmem, size = 0x12000, scoped, tag = 'internal scratch']
  %s0 = inlined_call_operand.hbm [shape: f32[8,128], index: 0, kind: input, shape index: {}]
  %s1 = inlined_call_operand.hbm [shape: f32[8,20], index: 1, kind: input, shape index: {}]
  %s2 = inlined_call_operand.hbm [shape: f32[8,384], index: 2, kind: output, shape index: {}]
  %s3 = sld [smem:[#allocation0]]
  $region26: #{tpu_custom_call.1} parent=0
    _
  %s5 = ssub.s32 1, %s3
  %s6 = scalar_select 0, %s5, %s3
  $region1: #{tpu_custom_call.1} parent=0
    #allocation2 [shape = 'u8[4096]{0}', space=vmem, size = 0x1000, scoped, tag = 'input window, operand 0, single buffered']
    #allocation3 [shape = 's32[1]{0}', space=sflag, size = 0x4, scoped, tag = 'scoped memory for tpu_custom_call.1']
    #allocation4 [shape = 's32[1]{0}', space=sflag, size = 0x4, scoped, tag = 'scoped memory for tpu_custom_call.1']
    #allocation5 [shape = 'u8[4096]{0}', space=vmem, size = 0x1000, scoped, tag = 'input window, operand 1, single buffered']
    #allocation6 [shape = 's32[1]{0}', space=sflag, size = 0x4, scoped, tag = 'scoped memory for tpu_custom_call.1']
    #allocation7 [shape = 'u8[12288]{0}', space=vmem, size = 0x3000, scoped, tag = 'output window, operand 0, single buffered']
    %7 = vsyncpa [#allocation3], 0
    %8 = vsyncpa [#allocation6], 0
    %9 = vsyncpa [#allocation4], 0
    // Predicated region
    $region2: #{tpu_custom_call.1} parent=1 // pred_check
      _
    $region3: #{tpu_custom_call.1} parent=1 // pred_check_branch
      %11 = sbr.rel (0) target = $region5
    $region4: #{tpu_custom_call.1} parent=1 // pred_region
      %s13 = ssub.s32 128, 128
      %14 = vsyncadd [#allocation3], %s13
      %s16 = sshll.u32 [#allocation2], 4
      %s17 = int_to_ptr.vmem [resolvable:$true] %s16
      %19 = dma.hbm_to_vmem [thread:$0]  %s0, 128, %s17, [#allocation3]
    $region5: #{tpu_custom_call.1} parent=1 // pred_fallthru
      _
    // Predicated region
    $region6: #{tpu_custom_call.1} parent=1 // pred_check
      _
    $region7: #{tpu_custom_call.1} parent=1 // pred_check_branch
      %21 = sbr.rel (0) target = $region9
    $region8: #{tpu_custom_call.1} parent=1 // pred_region
      %s23 = ssub.s32 128, 128
      %24 = vsyncadd [#allocation6], %s23
      %s26 = sshll.u32 [#allocation5], 4
      %s27 = int_to_ptr.vmem [resolvable:$true] %s26
      %29 = dma.hbm_to_vmem [thread:$0]  %s1, 128, %s27, [#allocation6]
    $region9: #{tpu_custom_call.1} parent=1 // pred_fallthru
      _
    // Predicated region
    $region10: #{tpu_custom_call.1} parent=1 // pred_check
      _
    $region11: #{tpu_custom_call.1} parent=1 // pred_check_branch
      %31 = sbr.rel (0) target = $region13
    $region12: #{tpu_custom_call.1} parent=1 // pred_region
      %32 = dma.done [#allocation3], 128
    $region13: #{tpu_custom_call.1} parent=1 // pred_fallthru
      _
    // Predicated region
    $region14: #{tpu_custom_call.1} parent=1 // pred_check
      _
    $region15: #{tpu_custom_call.1} parent=1 // pred_check_branch
      %34 = sbr.rel (0) target = $region17
    $region16: #{tpu_custom_call.1} parent=1 // pred_region
      %35 = dma.done [#allocation6], 128
    $region17: #{tpu_custom_call.1} parent=1 // pred_fallthru
      _
    %v36 = vld [vmem:[#allocation2] sm:$0xff]
    %v37 = vld [vmem:[#allocation5] sm:$0xff]
    %38 = vrot.lane.b32.xlu0 %v36, 127
    %v39 = vpop.permute.xlu0 %38
    %40 = vrot.lane.b32.xlu0 %v36, 126
    %v41 = vpop.permute.xlu0 %40
    %43 = vset.pattern.permute.xlu0 0
    %44 = vperm.xlu0 %43, %v37
    %v45 = vpop.permute.xlu0 %44
    %v47 = vmul.f32 %v36, %v45
    %48 = vset.pattern.permute.xlu0 3
    %49 = vperm.xlu0 %48, %v37
    %v50 = vpop.permute.xlu0 %49
    %v52 = vadd.f32 %v47, %v50
    %53 = vset.pattern.permute.xlu0 1
    %54 = vperm.xlu0 %53, %v37
    %v55 = vpop.permute.xlu0 %54
    %v57 = vmul.f32 %v39, %v55
    %v58 = vadd.f32 %v52, %v57
    %59 = vset.pattern.permute.xlu0 2
    %60 = vperm.xlu0 %59, %v37
    %v61 = vpop.permute.xlu0 %60
    %v63 = vmul.f32 %v41, %v61
    %v64 = vadd.f32 %v58, %v63
    %v65 = vmul.f32 %v64, 0.5
    %v66 = vmul.f32 %v64, 0.70710677
    %v67 = vand.u32 2147483647, %v66
    %v68 = vmul.f32 %v67, 0.3275911
    %v69 = vadd.f32 %v68, 1.0
    %v70 = vrcp.pop %v69
    %v71 = vmul.f32 1.0, %v70
    %v72 = vmul.f32 %v71, 1.0614054
    %v73 = vadd.f32 %v72, -1.4531521
    %v74 = vmul.f32 %v73, %v71
    %v75 = vadd.f32 %v74, 1.4214138
    %v76 = vmul.f32 %v75, %v71
    %v77 = vadd.f32 %v76, -0.28449672
    %v78 = vmul.f32 %v77, %v71
    %v79 = vadd.f32 %v78, 0.2548296
    %v80 = vmul.f32 %v79, %v71
    %v81 = vmul.f32 %v67, %v67
    %v82 = vsub.f32 0.0, %v81
    %v83 = vmul.f32 %v82, 1.442695
    %v84 = vpow.pop %v83
    %v85 = vmul.f32 %v80, %v84
    %v86 = vsub.f32 1.0, %v85
    %vm87 = vcmp.lt.f32.partialorder %v66, 0.0
    %v88 = vsub.f32 0.0, %v86
    %v89 = vsel %vm87, %v88, %v86
    %v90 = vadd.f32 %v89, 1.0
    %v91 = vmul.f32 %v65, %v90
    %92 = vrot.lane.b32.xlu0 %v91, 127
    %v93 = vpop.permute.xlu0 %92
    %94 = vrot.lane.b32.xlu0 %v91, 126
    %v95 = vpop.permute.xlu0 %94
    %96 = vset.pattern.permute.xlu0 4
    %97 = vperm.xlu0 %96, %v37
    %v98 = vpop.permute.xlu0 %97
    %v100 = vmul.f32 %v91, %v98
    %101 = vset.pattern.permute.xlu0 7
    %102 = vperm.xlu0 %101, %v37
    %v103 = vpop.permute.xlu0 %102
    %v105 = vadd.f32 %v100, %v103
    %106 = vset.pattern.permute.xlu0 5
    %107 = vperm.xlu0 %106, %v37
    %v108 = vpop.permute.xlu0 %107
    %v110 = vmul.f32 %v93, %v108
    %v111 = vadd.f32 %v105, %v110
    %112 = vset.pattern.permute.xlu0 6
    %113 = vperm.xlu0 %112, %v37
    %v114 = vpop.permute.xlu0 %113
    %v116 = vmul.f32 %v95, %v114
    %v117 = vadd.f32 %v111, %v116
    %v118 = vmul.f32 %v117, 0.5
    %v119 = vmul.f32 %v117, 0.70710677
    %v120 = vand.u32 2147483647, %v119
    %v121 = vmul.f32 %v120, 0.3275911
    %v122 = vadd.f32 %v121, 1.0
    %v123 = vrcp.pop %v122
    %v124 = vmul.f32 1.0, %v123
    %v125 = vmul.f32 %v124, 1.0614054
    %v126 = vadd.f32 %v125, -1.4531521
    %v127 = vmul.f32 %v126, %v124
    %v128 = vadd.f32 %v127, 1.4214138
    %v129 = vmul.f32 %v128, %v124
    %v130 = vadd.f32 %v129, -0.28449672
    %v131 = vmul.f32 %v130, %v124
    %v132 = vadd.f32 %v131, 0.2548296
    %v133 = vmul.f32 %v132, %v124
    %v134 = vmul.f32 %v120, %v120
    %v135 = vsub.f32 0.0, %v134
    %v136 = vmul.f32 %v135, 1.442695
    %v137 = vpow.pop %v136
    %v138 = vmul.f32 %v133, %v137
    %v139 = vsub.f32 1.0, %v138
    %vm140 = vcmp.lt.f32.partialorder %v119, 0.0
    %v141 = vsub.f32 0.0, %v139
    %v142 = vsel %vm140, %v141, %v139
    %v143 = vadd.f32 %v142, 1.0
    %v144 = vmul.f32 %v118, %v143
    %145 = vrot.lane.b32.xlu0 %v144, 127
    %v146 = vpop.permute.xlu0 %145
    %147 = vrot.lane.b32.xlu0 %v144, 126
    %v148 = vpop.permute.xlu0 %147
    %149 = vset.pattern.permute.xlu0 8
    %150 = vperm.xlu0 %149, %v37
    %v151 = vpop.permute.xlu0 %150
    %v153 = vmul.f32 %v144, %v151
    %154 = vset.pattern.permute.xlu0 17
    %155 = vperm.xlu0 %154, %v37
    %v156 = vpop.permute.xlu0 %155
    %v158 = vadd.f32 %v153, %v156
    %159 = vset.pattern.permute.xlu0 9
    %160 = vperm.xlu0 %159, %v37
    %v161 = vpop.permute.xlu0 %160
    %v163 = vmul.f32 %v146, %v161
    %v164 = vadd.f32 %v158, %v163
    %165 = vset.pattern.permute.xlu0 10
    %166 = vperm.xlu0 %165, %v37
    %v167 = vpop.permute.xlu0 %166
    %v169 = vmul.f32 %v148, %v167
    %v170 = vadd.f32 %v164, %v169
    %v171 = vmul.f32 %v170, 0.5
    %v172 = vmul.f32 %v170, 0.70710677
    %v173 = vand.u32 2147483647, %v172
    %v174 = vmul.f32 %v173, 0.3275911
    %v175 = vadd.f32 %v174, 1.0
    %v176 = vrcp.pop %v175
    %v177 = vmul.f32 1.0, %v176
    %v178 = vmul.f32 %v177, 1.0614054
    %v179 = vadd.f32 %v178, -1.4531521
    %v180 = vmul.f32 %v179, %v177
    %v181 = vadd.f32 %v180, 1.4214138
    %v182 = vmul.f32 %v181, %v177
    %v183 = vadd.f32 %v182, -0.28449672
    %v184 = vmul.f32 %v183, %v177
    %v185 = vadd.f32 %v184, 0.2548296
    %v186 = vmul.f32 %v185, %v177
    %v187 = vmul.f32 %v173, %v173
    %v188 = vsub.f32 0.0, %v187
    %v189 = vmul.f32 %v188, 1.442695
    %v190 = vpow.pop %v189
    %v191 = vmul.f32 %v186, %v190
    %v192 = vsub.f32 1.0, %v191
    %vm193 = vcmp.lt.f32.partialorder %v172, 0.0
    %v194 = vsub.f32 0.0, %v192
    %v195 = vsel %vm193, %v194, %v192
    %v196 = vadd.f32 %v195, 1.0
    %v197 = vmul.f32 %v171, %v196
    %198 = vst [vmem:[#allocation7] sm:$0xff] %v197
    %199 = vset.pattern.permute.xlu0 11
    %200 = vperm.xlu0 %199, %v37
    %v201 = vpop.permute.xlu0 %200
    %v203 = vmul.f32 %v144, %v201
    %204 = vset.pattern.permute.xlu0 18
    %205 = vperm.xlu0 %204, %v37
    %v206 = vpop.permute.xlu0 %205
    %v208 = vadd.f32 %v203, %v206
    %209 = vset.pattern.permute.xlu0 12
    %210 = vperm.xlu0 %209, %v37
    %v211 = vpop.permute.xlu0 %210
    %v213 = vmul.f32 %v146, %v211
    %v214 = vadd.f32 %v208, %v213
    %215 = vset.pattern.permute.xlu0 13
    %216 = vperm.xlu0 %215, %v37
    %v217 = vpop.permute.xlu0 %216
    %v219 = vmul.f32 %v148, %v217
    %v220 = vadd.f32 %v214, %v219
    %v221 = vmul.f32 %v220, 0.5
    %v222 = vmul.f32 %v220, 0.70710677
    %v223 = vand.u32 2147483647, %v222
    %v224 = vmul.f32 %v223, 0.3275911
    %v225 = vadd.f32 %v224, 1.0
    %v226 = vrcp.pop %v225
    %v227 = vmul.f32 1.0, %v226
    %v228 = vmul.f32 %v227, 1.0614054
    %v229 = vadd.f32 %v228, -1.4531521
    %v230 = vmul.f32 %v229, %v227
    %v231 = vadd.f32 %v230, 1.4214138
    %v232 = vmul.f32 %v231, %v227
    %v233 = vadd.f32 %v232, -0.28449672
    %v234 = vmul.f32 %v233, %v227
    %v235 = vadd.f32 %v234, 0.2548296
    %v236 = vmul.f32 %v235, %v227
    %v237 = vmul.f32 %v223, %v223
    %v238 = vsub.f32 0.0, %v237
    %v239 = vmul.f32 %v238, 1.442695
    %v240 = vpow.pop %v239
    %v241 = vmul.f32 %v236, %v240
    %v242 = vsub.f32 1.0, %v241
    %vm243 = vcmp.lt.f32.partialorder %v222, 0.0
    %v244 = vsub.f32 0.0, %v242
    %v245 = vsel %vm243, %v244, %v242
    %v246 = vadd.f32 %v245, 1.0
    %v247 = vmul.f32 %v221, %v246
    %248 = vst [vmem:[#allocation7 + $0x8] sm:$0xff] %v247
    %249 = vset.pattern.permute.xlu0 14
    %250 = vperm.xlu0 %249, %v37
    %v251 = vpop.permute.xlu0 %250
    %v253 = vmul.f32 %v144, %v251
    %254 = vset.pattern.permute.xlu0 19
    %255 = vperm.xlu0 %254, %v37
    %v256 = vpop.permute.xlu0 %255
    %v258 = vadd.f32 %v253, %v256
    %259 = vset.pattern.permute.xlu0 15
    %260 = vperm.xlu0 %259, %v37
    %v261 = vpop.permute.xlu0 %260
    %v263 = vmul.f32 %v146, %v261
    %v264 = vadd.f32 %v258, %v263
    %265 = vset.pattern.permute.xlu0 16
    %266 = vperm.xlu0 %265, %v37
    %v267 = vpop.permute.xlu0 %266
    %v269 = vmul.f32 %v148, %v267
    %v270 = vadd.f32 %v264, %v269
    %v271 = vmul.f32 %v270, 0.5
    %v272 = vmul.f32 %v270, 0.70710677
    %v273 = vand.u32 2147483647, %v272
    %v274 = vmul.f32 %v273, 0.3275911
    %v275 = vadd.f32 %v274, 1.0
    %v276 = vrcp.pop %v275
    %v277 = vmul.f32 1.0, %v276
    %v278 = vmul.f32 %v277, 1.0614054
    %v279 = vadd.f32 %v278, -1.4531521
    %v280 = vmul.f32 %v279, %v277
    %v281 = vadd.f32 %v280, 1.4214138
    %v282 = vmul.f32 %v281, %v277
    %v283 = vadd.f32 %v282, -0.28449672
    %v284 = vmul.f32 %v283, %v277
    %v285 = vadd.f32 %v284, 0.2548296
    %v286 = vmul.f32 %v285, %v277
    %v287 = vmul.f32 %v273, %v273
    %v288 = vsub.f32 0.0, %v287
    %v289 = vmul.f32 %v288, 1.442695
    %v290 = vpow.pop %v289
    %v291 = vmul.f32 %v286, %v290
    %v292 = vsub.f32 1.0, %v291
    %vm293 = vcmp.lt.f32.partialorder %v272, 0.0
    %v294 = vsub.f32 0.0, %v292
    %v295 = vsel %vm293, %v294, %v292
    %v296 = vadd.f32 %v295, 1.0
    %v297 = vmul.f32 %v271, %v296
    %298 = vst [vmem:[#allocation7 + $0x10] sm:$0xff] %v297
    // Predicated region
    $region18: #{tpu_custom_call.1} parent=1 // pred_check
      _
    $region19: #{tpu_custom_call.1} parent=1 // pred_check_branch
      %300 = sbr.rel (0) target = $region21
    $region20: #{tpu_custom_call.1} parent=1 // pred_region
      %s302 = ssub.s32 384, 384
      %303 = vsyncadd [#allocation4], %s302
      %s305 = sshll.u32 [#allocation7], 4
      %s306 = int_to_ptr.vmem [resolvable:$true] %s305
      %308 = dma.vmem_to_hbm [thread:$0]  %s306, 384, %s2, [#allocation4]
    $region21: #{tpu_custom_call.1} parent=1 // pred_fallthru
      _
    // Predicated region
    $region22: #{tpu_custom_call.1} parent=1 // pred_check
      _
    $region23: #{tpu_custom_call.1} parent=1 // pred_check_branch
      %310 = sbr.rel (0) target = $region25
    $region24: #{tpu_custom_call.1} parent=1 // pred_region
      %311 = dma.done [#allocation4], 384
    $region25: #{tpu_custom_call.1} parent=1 // pred_fallthru
      _
    %312 = vsyncpa [#allocation3], 1
    %313 = vsyncpa [#allocation6], 1
    %314 = vsyncpa [#allocation4], 1

</llo_original>
